<compile_context>
chip_gen: v7x
topology: tpu7x:2x2x1
jax: 0.10.0
libtpu: 0.0.40
codegen_flags: <defaults>
</compile_context>

<pallas_src>
import functools

import jax
import jax.numpy as jnp
from jax.experimental import pallas as pl
from jax.experimental.pallas import tpu as pltpu


# ----------------------------------------------------------------------------
# Fixed operand order for the fused kernel (weights + one packed bias vector)
# ----------------------------------------------------------------------------
FUSED_PARAM_ORDER = (
    "w1_all", "w2_all", "w3_pad", "w_ac", "w_heads", "w_ace_heads", "b_all",
)


def _round_up(x, m):
    return ((x + m - 1) // m) * m


def _bias_layout(fc1, fc2, nclass, res_size):
    """Packed bias vector: [b1_all | b2_all | b3 | b_ac | b_heads], 128-aligned."""
    widths = (4 * fc1, 4 * fc2, nclass, fc2, 3 * res_size)
    offs, cur = [], 0
    for w in widths:
        offs.append(cur)
        cur = _round_up(cur + w, 128)
    return tuple(offs), widths, cur


def _out_layout(fc2, nclass, res_size):
    """Single lane-dense output slab: [stage2 | heads | ace | img_cls | pad]."""
    o_s2 = 0
    o_heads = 4 * fc2
    o_ace = o_heads + 3 * res_size
    o_cls = o_ace + fc2
    raw = o_cls + nclass
    total = _round_up(raw, 128)
    return o_s2, o_heads, o_ace, o_cls, total, total - raw


# ----------------------------------------------------------------------------
# Fused kernel: the whole forward (13 linears + class-mean + log-softmax + all
# concats) in 6 MXU matmuls, everything resident in VMEM / vregs.
# ----------------------------------------------------------------------------
def _fused_forward_kernel(
    x_ref, w1_ref, w2_ref, w3_ref, wac_ref, wh_ref, whace_ref, b_ref,
    out_ref,
    *, fc1, fc2, nclass, res_size,
    b1_off, b2_off, b3_off, bac_off, bh_off,
    o_s2, o_heads, o_ace, o_cls, o_pad, out_width,
):
    f32, bf16 = jnp.float32, jnp.bfloat16
    H1, H2, NH = 4 * fc1, 4 * fc2, 3 * res_size
    relu = lambda v: jnp.maximum(v, 0.0)

    def mxu(a, w_ref):          # bf16 operands, f32 accumulation on the MXU
        return jnp.dot(a.astype(bf16), w_ref[...], preferred_element_type=f32)

    # packed biases (f32), static 128-aligned offsets
    b1 = b_ref[:, b1_off:b1_off + H1]
    b2 = b_ref[:, b2_off:b2_off + H2]
    b3 = b_ref[:, b3_off:b3_off + nclass]
    bac = b_ref[:, bac_off:bac_off + fc2]
    bh = b_ref[:, bh_off:bh_off + NH]

    x = x_ref[...]                                   # (BT, res+2*att)  bf16
    # stage 1: all four fc1's in one block matmul (BN folded; dropout = identity)
    h_all = relu(mxu(x, w1_ref) + b1)                # (BT, 4*fc1)  f32
    # stage 2: all four fc2's (block diagonal) -> [img_com | img_spe | text | agg]
    stage2 = mxu(h_all, w2_ref) + b2                 # (BT, 4*fc2)  f32

    # classifier + fused log-softmax (w3 zero-padded to consume packed stage2)
    logits = mxu(stage2, w3_ref) + b3                # (BT, nclass)
    m = jnp.max(logits, axis=-1, keepdims=True)
    e = jnp.exp(logits - m)
    log_sm = logits - m - jnp.log(jnp.sum(e, axis=-1, keepdims=True))

    r2 = relu(stage2)                                # [r_com | r_spe | r_text | r_agg]
    # fc_att_concat (zero rows for the image halves)
    ace = mxu(r2, wac_ref) + bac                     # (BT, fc2) att_concat_embed
    # three reconstruction heads in one matmul; the relu(ace) term only feeds
    # the img_text_agg_reconst columns via a zero-padded weight (stays on MXU).
    heads = relu(mxu(r2, wh_ref) + mxu(relu(ace), whace_ref) + bh)   # (BT, 3*res)

    # single lane-dense output slab
    out_ref[:, o_s2:o_s2 + H2] = stage2
    out_ref[:, o_heads:o_heads + NH] = heads
    out_ref[:, o_ace:o_ace + fc2] = ace
    out_ref[:, o_cls:o_cls + nclass] = log_sm
    if o_pad > 0:
        out_ref[:, out_width - o_pad:out_width] = jnp.zeros(
            (out_ref.shape[0], o_pad), f32)


# ----------------------------------------------------------------------------
# Wrapper: one pallas_call over a "parallel" batch-tile grid.
# ----------------------------------------------------------------------------
def forward(fp, res, att, att_agg):
    B = int(res.shape[0])
    att_size = int(att.shape[1])
    nclass_all = int(att_agg.shape[1]) // att_size

    # static dims derived from packed-weight shapes (works under jit)
    fc2 = int(fp["w_ac"].shape[1])
    nclass = int(fp["w3_pad"].shape[1])
    fc1 = int(fp["w2_all"].shape[0]) // 4
    res_size = int(fp["w_heads"].shape[1]) // 3
    K1 = int(fp["w1_all"].shape[0])
    assert res_size == int(res.shape[1])
    assert K1 == res_size + 2 * att_size

    b_offs, _, _ = _bias_layout(fc1, fc2, nclass, res_size)
    o_s2, o_heads, o_ace, o_cls, out_width, o_pad = _out_layout(fc2, nclass, res_size)

    # class mean + input packing + bf16 cast (cheap fused XLA ops)
    att_mean = att_agg.reshape(B, nclass_all, att_size).mean(axis=1)
    x_all = jnp.concatenate([res, att, att_mean], axis=1).astype(jnp.bfloat16)

    # batch tiling: one "parallel" grid axis; weights resident across tiles
    BT = 128 if B >= 128 else _round_up(max(B, 1), 8)
    PB = _round_up(B, BT)
    if PB != B:
        x_all = jnp.pad(x_all, ((0, PB - B), (0, 0)))
    nb = PB // BT

    args = tuple(fp[name] for name in FUSED_PARAM_ORDER)
    w_specs = [pl.BlockSpec(a.shape, lambda i: (0, 0)) for a in args]
    in_specs = [pl.BlockSpec((BT, K1), lambda i: (i, 0))] + w_specs
    out_spec = pl.BlockSpec((BT, out_width), lambda i: (i, 0))

    # advisory cost estimate from the *logical* (un-padded) layer dims
    macs = (2 * res_size * fc1 + 2 * att_size * fc1   # four fc1
            + 4 * fc1 * fc2                           # four fc2
            + fc2 * nclass                            # classifier
            + 2 * fc2 * fc2                           # fc_att_concat
            + 3 * 2 * fc2 * res_size)                 # three reconstruction heads
    bytes_accessed = (int(x_all.size) * 2
                      + sum(int(a.size) * jnp.dtype(a.dtype).itemsize for a in args)
                      + PB * out_width * 4)

    kern = functools.partial(
        _fused_forward_kernel,
        fc1=fc1, fc2=fc2, nclass=nclass, res_size=res_size,
        b1_off=b_offs[0], b2_off=b_offs[1], b3_off=b_offs[2],
        bac_off=b_offs[3], bh_off=b_offs[4],
        o_s2=o_s2, o_heads=o_heads, o_ace=o_ace, o_cls=o_cls,
        o_pad=o_pad, out_width=out_width)

    out_full = pl.pallas_call(
        kern,
        out_shape=jax.ShapeDtypeStruct((PB, out_width), jnp.float32),
        grid=(nb,),
        in_specs=in_specs,
        out_specs=out_spec,
        compiler_params=pltpu.CompilerParams(
            dimension_semantics=("parallel",)),
        cost_estimate=pl.CostEstimate(
            flops=2 * B * macs,
            transcendentals=B * (nclass + 1),
            bytes_accessed=int(bytes_accessed)),
    )(x_all, *args)

    # host-side unpack of the lane-dense slab (static slices, fused by XLA)
    out = out_full[:B]
    img_embed_com = out[:, 0:fc2]
    img_embed_spe = out[:, fc2:2 * fc2]
    text_embed = out[:, 2 * fc2:3 * fc2]
    img_reconst = out[:, o_heads:o_heads + res_size]
    img_text_reconst = out[:, o_heads + res_size:o_heads + 2 * res_size]
    img_text_agg_reconst = out[:, o_heads + 2 * res_size:o_heads + 3 * res_size]
    att_concat_embed = out[:, o_ace:o_ace + fc2]
    img_cls = out[:, o_cls:o_cls + nclass]
    return (img_embed_com, img_embed_spe, img_cls, text_embed, att_concat_embed,
            img_reconst, img_text_reconst, img_text_agg_reconst)


# ----------------------------------------------------------------------------
# Deterministic raw (PyTorch-like) parameters
# ----------------------------------------------------------------------------
def _linear_params(key, fan_in, fan_out):
    kw, kb = jax.random.split(key)
    w = jax.random.normal(kw, (fan_in, fan_out), jnp.float32) * 0.05
    b = jax.random.normal(kb, (fan_out,), jnp.float32) * 0.05
    return w, b


def _bn_params(key, n):
    kg, kb, km, kv = jax.random.split(key, 4)
    gamma = 1.0 + 0.1 * jax.random.normal(kg, (n,), jnp.float32)
    beta = 0.1 * jax.random.normal(kb, (n,), jnp.float32)
    running_mean = 0.1 * jax.random.normal(km, (n,), jnp.float32)
    running_var = 0.5 + jnp.abs(jax.random.normal(kv, (n,), jnp.float32))
    eps = 1e-5
    scale = gamma / jnp.sqrt(running_var + eps)
    shift = beta - running_mean * scale
    return scale.reshape(1, n), shift.reshape(1, n)


def make_params(key, res_size, att_size, fc1, fc2, nclass):
    names_lin = [
        ("fc1_img_com", res_size, fc1), ("fc2_img_com", fc1, fc2),
        ("fc3_img_com", fc2, nclass),
        ("fc1_img_spe", res_size, fc1), ("fc2_img_spe", fc1, fc2),
        ("fc1_text", att_size, fc1), ("fc2_text", fc1, fc2),
        ("fc1_agg", att_size, fc1), ("fc2_agg", fc1, fc2),
        ("fc_att_concat", fc2 * 2, fc2),
        ("fc_img_text_reconst", fc2 * 2, res_size),
        ("fc_img_reconst", fc2 * 2, res_size),
        ("fc_img_text_agg_reconst", fc2 * 2, res_size),
    ]
    names_bn = [
        ("fc1_img_com_bn", fc1), ("fc2_img_com_bn", fc2),
        ("fc1_img_spe_bn", fc1), ("fc2_img_spe_bn", fc2),
        ("fc1_text_bn", fc1), ("fc2_text_bn", fc2),
        ("fc1_agg_bn", fc1), ("fc2_agg_bn", fc2),
        ("fc_att_concat_bn", fc2),
    ]
    keys = jax.random.split(key, len(names_lin) + len(names_bn))
    p = {}
    for k, (name, fi, fo) in zip(keys[:len(names_lin)], names_lin):
        w, b = _linear_params(k, fi, fo)
        p[name + "_w"], p[name + "_b"] = w, b
    for k, (name, n) in zip(keys[len(names_lin):], names_bn):
        s, sh = _bn_params(k, n)
        p[name + "_scale"], p[name + "_shift"] = s, sh
    return p


# ----------------------------------------------------------------------------
# Host-side parameter fusion: BN fold, branch packing, zero-padded consumers,
# bf16 weights, packed biases.
# ----------------------------------------------------------------------------
def fuse_params(p):
    res_size = int(p["fc1_img_com_w"].shape[0])
    fc1 = int(p["fc1_img_com_w"].shape[1])
    fc2 = int(p["fc2_img_com_w"].shape[1])
    att_size = int(p["fc1_text_w"].shape[0])
    nclass = int(p["fc3_img_com_w"].shape[1])
    H1, H2, NH = 4 * fc1, 4 * fc2, 3 * res_size
    f32, bf16 = jnp.float32, jnp.bfloat16

    def fold(name):
        scale = p[name + "_bn_scale"]
        shift = p[name + "_bn_shift"]
        return p[name + "_w"] * scale, p[name + "_b"].reshape(1, -1) * scale + shift

    w1c, b1c = fold("fc1_img_com"); w1s, b1s = fold("fc1_img_spe")
    w2c, b2c = fold("fc2_img_com"); w2s, b2s = fold("fc2_img_spe")
    w1t, b1t = fold("fc1_text");    w2t, b2t = fold("fc2_text")
    w1a, b1a = fold("fc1_agg");     w2a, b2a = fold("fc2_agg")
    wac, bac = fold("fc_att_concat")

    # stage 1: x_all = [res | att | att_mean]  ->  [h_com | h_spe | h_text | h_agg]
    w1_all = jnp.zeros((res_size + 2 * att_size, H1), f32)
    w1_all = w1_all.at[:res_size, 0 * fc1:1 * fc1].set(w1c)
    w1_all = w1_all.at[:res_size, 1 * fc1:2 * fc1].set(w1s)
    w1_all = w1_all.at[res_size:res_size + att_size, 2 * fc1:3 * fc1].set(w1t)
    w1_all = w1_all.at[res_size + att_size:, 3 * fc1:4 * fc1].set(w1a)
    b1_all = jnp.concatenate([b1c, b1s, b1t, b1a], axis=1)

    # stage 2: block diagonal -> stage2 = [img_com | img_spe | text_embed | agg_embed]
    w2_all = jnp.zeros((H1, H2), f32)
    for i, w in enumerate((w2c, w2s, w2t, w2a)):
        w2_all = w2_all.at[i * fc1:(i + 1) * fc1, i * fc2:(i + 1) * fc2].set(w)
    b2_all = jnp.concatenate([b2c, b2s, b2t, b2a], axis=1)

    # classifier consumes packed stage2 (only the img_com rows are non-zero)
    w3_pad = jnp.zeros((H2, nclass), f32).at[:fc2].set(p["fc3_img_com_w"])
    b3 = p["fc3_img_com_b"].reshape(1, -1)

    # fc_att_concat consumes relu(stage2) (only the text|agg rows non-zero)
    w_ac = jnp.zeros((H2, fc2), f32).at[2 * fc2:].set(wac)

    # three reconstruction heads in ONE matmul over relu(stage2):
    #   cols [0,res) img_reconst, [res,2res) img_text_reconst, [2res,3res) img_text_agg
    w_ir = p["fc_img_reconst_w"]               # rows: [img_com | img_spe]
    w_itr = p["fc_img_text_reconst_w"]         # rows: [text    | img_spe]
    w_itar = p["fc_img_text_agg_reconst_w"]    # rows: [ace     | img_spe]
    w_heads = jnp.zeros((H2, NH), f32)
    w_heads = w_heads.at[:2 * fc2, :res_size].set(w_ir)
    w_heads = w_heads.at[2 * fc2:3 * fc2, res_size:2 * res_size].set(w_itr[:fc2])
    w_heads = w_heads.at[fc2:2 * fc2, res_size:2 * res_size].set(w_itr[fc2:])
    w_heads = w_heads.at[fc2:2 * fc2, 2 * res_size:].set(w_itar[fc2:])
    # relu(att_concat_embed) contribution -> only the img_text_agg columns
    w_ace_heads = jnp.zeros((fc2, NH), f32).at[:, 2 * res_size:].set(w_itar[:fc2])
    b_heads = jnp.concatenate(
        [p["fc_img_reconst_b"].reshape(1, -1),
         p["fc_img_text_reconst_b"].reshape(1, -1),
         p["fc_img_text_agg_reconst_b"].reshape(1, -1)], axis=1)

    # one packed bias vector (f32), 128-aligned segments
    b_offs, _, b_total = _bias_layout(fc1, fc2, nclass, res_size)
    b_all = jnp.zeros((1, b_total), f32)
    for off, seg in zip(b_offs, (b1_all, b2_all, b3, bac, b_heads)):
        b_all = b_all.at[:, off:off + seg.shape[1]].set(seg)

    return {
        "w1_all": w1_all.astype(bf16),
        "w2_all": w2_all.astype(bf16),
        "w3_pad": w3_pad.astype(bf16),
        "w_ac": w_ac.astype(bf16),
        "w_heads": w_heads.astype(bf16),
        "w_ace_heads": w_ace_heads.astype(bf16),
        "b_all": b_all,
    }


# ----------------------------------------------------------------------------
# Pure-JAX reference (mirrors the PyTorch forward in eval mode) for checking.
# ----------------------------------------------------------------------------
def reference_forward(p, res, att, att_agg, *, nclass_all, att_size):
    relu = lambda x: jnp.maximum(x, 0.0)
    lin = lambda x, n: x @ p[n + "_w"] + p[n + "_b"]
    bn = lambda x, n: x * p[n + "_bn_scale"] + p[n + "_bn_shift"]

    h = relu(bn(lin(res, "fc1_img_com"), "fc1_img_com"))
    img_embed_com = bn(lin(h, "fc2_img_com"), "fc2_img_com")
    img_cls = jax.nn.log_softmax(lin(img_embed_com, "fc3_img_com"), axis=1)
    h = relu(bn(lin(res, "fc1_img_spe"), "fc1_img_spe"))
    img_embed_spe = bn(lin(h, "fc2_img_spe"), "fc2_img_spe")
    h = relu(bn(lin(att, "fc1_text"), "fc1_text"))
    text_embed = bn(lin(h, "fc2_text"), "fc2_text")
    att_mean = att_agg.reshape(-1, nclass_all, att_size).mean(axis=1)
    h = relu(bn(lin(att_mean, "fc1_agg"), "fc1_agg"))
    text_embed_agg = bn(lin(h, "fc2_agg"), "fc2_agg")
    att_concat = relu(jnp.concatenate([text_embed, text_embed_agg], axis=1))
    att_concat_embed = bn(lin(att_concat, "fc_att_concat"), "fc_att_concat")
    img_concat = relu(jnp.concatenate([img_embed_com, img_embed_spe], axis=1))
    img_reconst = relu(lin(img_concat, "fc_img_reconst"))
    img_text_concat = relu(jnp.concatenate([text_embed, img_embed_spe], axis=1))
    img_text_reconst = relu(lin(img_text_concat, "fc_img_text_reconst"))
    img_text_agg_concat = relu(jnp.concatenate([att_concat_embed, img_embed_spe], axis=1))
    img_text_agg_reconst = relu(lin(img_text_agg_concat, "fc_img_text_agg_reconst"))
    return (img_embed_com, img_embed_spe, img_cls, text_embed, att_concat_embed,
            img_reconst, img_text_reconst, img_text_agg_reconst)


# ----------------------------------------------------------------------------
if __name__ == "__main__":
    # small synthetic config (mirrors opt.* / nclass)
    BATCH = 8
    RES_SIZE = 64      # opt.resSize
    ATT_SIZE = 32      # opt.attSize
    FC1 = 64           # opt.fc1_size
    FC2 = 32           # opt.fc2_size
    NCLASS = 16        # nclass
    NCLASS_ALL = 10    # opt.nclass_all

    key = jax.random.PRNGKey(0)
    kp, kr, ka, kg = jax.random.split(key, 4)

    raw_params = make_params(kp, RES_SIZE, ATT_SIZE, FC1, FC2, NCLASS)
    fused_params = fuse_params(raw_params)

    res = jax.random.normal(kr, (BATCH, RES_SIZE), jnp.float32)
    att = jax.random.normal(ka, (BATCH, ATT_SIZE), jnp.float32)
    att_agg = jax.random.normal(kg, (BATCH, NCLASS_ALL * ATT_SIZE), jnp.float32)

    fwd = jax.jit(forward)
    outs = jax.block_until_ready(fwd(fused_params, res, att, att_agg))

    expected_shapes = [
        (BATCH, FC2), (BATCH, FC2), (BATCH, NCLASS), (BATCH, FC2), (BATCH, FC2),
        (BATCH, RES_SIZE), (BATCH, RES_SIZE), (BATCH, RES_SIZE),
    ]
    assert [tuple(o.shape) for o in outs] == expected_shapes

    # numerical check vs. pure-JAX f32 reference; scaled tolerance sized for the
    # bf16 matmul operands (accumulation stays f32).
    refs = reference_forward(raw_params, res, att, att_agg,
                             nclass_all=NCLASS_ALL, att_size=ATT_SIZE)
    for o, r in zip(outs, refs):
        assert bool(jnp.all(jnp.isfinite(o)))
        err = float(jnp.max(jnp.abs(o - r) / (1.0 + jnp.abs(r))))
        assert err < 1.5e-2, err

    print("KERNEL_OK")
</pallas_src>

<mosaic_0001>
module attributes {stable_mosaic.version = 11 : i64} {
  func.func @_fused_forward_kernel(%arg0: i32, %arg1: memref<8x128xbf16, #tpu.memory_space<vmem>>, %arg2: memref<128x256xbf16, #tpu.memory_space<vmem>>, %arg3: memref<256x128xbf16, #tpu.memory_space<vmem>>, %arg4: memref<128x16xbf16, #tpu.memory_space<vmem>>, %arg5: memref<128x32xbf16, #tpu.memory_space<vmem>>, %arg6: memref<128x192xbf16, #tpu.memory_space<vmem>>, %arg7: memref<32x192xbf16, #tpu.memory_space<vmem>>, %arg8: memref<1x896xf32, #tpu.memory_space<vmem>>, %arg9: memref<8x384xf32, #tpu.memory_space<vmem>>) attributes {dimension_semantics = [#tpu.dimension_semantics<parallel>], iteration_bounds = array<i64: 1>, scalar_prefetch = 0 : i64, scratch_operands = 0 : i64, tpu.core_type = #tpu.core_type<tc>, window_params = [{transform_indices = @transform_0, window_bounds = array<i64: 8, 128>}, {pipeline_mode = #tpu.pipeline_mode<synchronous>, transform_indices = @transform_1, window_bounds = array<i64: 128, 256>}, {pipeline_mode = #tpu.pipeline_mode<synchronous>, transform_indices = @transform_2, window_bounds = array<i64: 256, 128>}, {pipeline_mode = #tpu.pipeline_mode<synchronous>, transform_indices = @transform_3, window_bounds = array<i64: 128, 16>}, {pipeline_mode = #tpu.pipeline_mode<synchronous>, transform_indices = @transform_4, window_bounds = array<i64: 128, 32>}, {pipeline_mode = #tpu.pipeline_mode<synchronous>, transform_indices = @transform_5, window_bounds = array<i64: 128, 192>}, {pipeline_mode = #tpu.pipeline_mode<synchronous>, transform_indices = @transform_6, window_bounds = array<i64: 32, 192>}, {pipeline_mode = #tpu.pipeline_mode<synchronous>, transform_indices = @transform_7, window_bounds = array<i64: 1, 896>}, {transform_indices = @transform_8, window_bounds = array<i64: 8, 384>}]} {
    %c0 = arith.constant 0 : index
    %c0_0 = arith.constant 0 : index
    %0 = vector.load %arg8[%c0, %c0_0] : memref<1x896xf32, #tpu.memory_space<vmem>>, vector<1x256xf32>
    %c0_1 = arith.constant 0 : index
    %c256 = arith.constant 256 : index
    %1 = vector.load %arg8[%c0_1, %c256] : memref<1x896xf32, #tpu.memory_space<vmem>>, vector<1x128xf32>
    %c0_2 = arith.constant 0 : index
    %c384 = arith.constant 384 : index
    %2 = vector.load %arg8[%c0_2, %c384] : memref<1x896xf32, #tpu.memory_space<vmem>>, vector<1x16xf32>
    %c0_3 = arith.constant 0 : index
    %c512 = arith.constant 512 : index
    %3 = vector.load %arg8[%c0_3, %c512] : memref<1x896xf32, #tpu.memory_space<vmem>>, vector<1x32xf32>
    %c0_4 = arith.constant 0 : index
    %c640 = arith.constant 640 : index
    %4 = vector.load %arg8[%c0_4, %c640] : memref<1x896xf32, #tpu.memory_space<vmem>>, vector<1x192xf32>
    %c0_5 = arith.constant 0 : index
    %c0_6 = arith.constant 0 : index
    %5 = vector.load %arg1[%c0_5, %c0_6] : memref<8x128xbf16, #tpu.memory_space<vmem>>, vector<8x128xbf16>
    %c0_7 = arith.constant 0 : index
    %c0_8 = arith.constant 0 : index
    %6 = vector.load %arg2[%c0_7, %c0_8] : memref<128x256xbf16, #tpu.memory_space<vmem>>, vector<128x256xbf16>
    %cst = arith.constant dense<0.000000e+00> : vector<8x256xf32>
    %7 = tpu.matmul %5, %6, %cst {dimension_numbers = #tpu.dot_dimension_numbers<[1], [0], [0], [1], [0, 0, 1, 1], [], []>} : vector<8x128xbf16>, vector<128x256xbf16>, vector<8x256xf32> -> vector<8x256xf32>
    %8 = vector.broadcast %0 : vector<1x256xf32> to vector<8x256xf32>
    %9 = arith.addf %7, %8 : vector<8x256xf32>
    %cst_9 = arith.constant 0.000000e+00 : f32
    %10 = vector.broadcast %cst_9 : f32 to vector<8x256xf32>
    %11 = arith.maximumf %9, %10 : vector<8x256xf32>
    %12 = arith.truncf %11 : vector<8x256xf32> to vector<8x256xbf16>
    %c0_10 = arith.constant 0 : index
    %c0_11 = arith.constant 0 : index
    %13 = vector.load %arg3[%c0_10, %c0_11] : memref<256x128xbf16, #tpu.memory_space<vmem>>, vector<256x128xbf16>
    %cst_12 = arith.constant dense<0.000000e+00> : vector<8x128xf32>
    %14 = tpu.matmul %12, %13, %cst_12 {dimension_numbers = #tpu.dot_dimension_numbers<[1], [0], [0], [1], [0, 0, 1, 1], [], []>} : vector<8x256xbf16>, vector<256x128xbf16>, vector<8x128xf32> -> vector<8x128xf32>
    %15 = vector.broadcast %1 : vector<1x128xf32> to vector<8x128xf32>
    %16 = arith.addf %14, %15 : vector<8x128xf32>
    %17 = arith.truncf %16 : vector<8x128xf32> to vector<8x128xbf16>
    %c0_13 = arith.constant 0 : index
    %c0_14 = arith.constant 0 : index
    %18 = vector.load %arg4[%c0_13, %c0_14] : memref<128x16xbf16, #tpu.memory_space<vmem>>, vector<128x16xbf16>
    %cst_15 = arith.constant dense<0.000000e+00> : vector<8x16xf32>
    %19 = tpu.matmul %17, %18, %cst_15 {dimension_numbers = #tpu.dot_dimension_numbers<[1], [0], [0], [1], [0, 0, 1, 1], [], []>} : vector<8x128xbf16>, vector<128x16xbf16>, vector<8x16xf32> -> vector<8x16xf32>
    %20 = vector.broadcast %2 : vector<1x16xf32> to vector<8x16xf32>
    %21 = arith.addf %19, %20 : vector<8x16xf32>
    %cst_16 = arith.constant dense<0xFF800000> : vector<8xf32>
    %22 = vector.multi_reduction <maximumf>, %21, %cst_16 [1] : vector<8x16xf32> to vector<8xf32>
    %23 = vector.shape_cast %22 : vector<8xf32> to vector<8x1xf32>
    %24 = vector.broadcast %23 : vector<8x1xf32> to vector<8x16xf32>
    %25 = arith.subf %21, %24 : vector<8x16xf32>
    %26 = math.exp %25 : vector<8x16xf32>
    %27 = vector.broadcast %23 : vector<8x1xf32> to vector<8x16xf32>
    %28 = arith.subf %21, %27 : vector<8x16xf32>
    %cst_17 = arith.constant dense<0.000000e+00> : vector<8xf32>
    %29 = vector.multi_reduction <add>, %26, %cst_17 [1] : vector<8x16xf32> to vector<8xf32>
    %30 = vector.shape_cast %29 : vector<8xf32> to vector<8x1xf32>
    %31 = math.log %30 : vector<8x1xf32>
    %32 = vector.broadcast %31 : vector<8x1xf32> to vector<8x16xf32>
    %33 = arith.subf %28, %32 : vector<8x16xf32>
    %cst_18 = arith.constant 0.000000e+00 : f32
    %34 = vector.broadcast %cst_18 : f32 to vector<8x128xf32>
    %35 = arith.maximumf %16, %34 : vector<8x128xf32>
    %36 = arith.truncf %35 : vector<8x128xf32> to vector<8x128xbf16>
    %c0_19 = arith.constant 0 : index
    %c0_20 = arith.constant 0 : index
    %37 = vector.load %arg5[%c0_19, %c0_20] : memref<128x32xbf16, #tpu.memory_space<vmem>>, vector<128x32xbf16>
    %cst_21 = arith.constant dense<0.000000e+00> : vector<8x32xf32>
    %38 = tpu.matmul %36, %37, %cst_21 {dimension_numbers = #tpu.dot_dimension_numbers<[1], [0], [0], [1], [0, 0, 1, 1], [], []>} : vector<8x128xbf16>, vector<128x32xbf16>, vector<8x32xf32> -> vector<8x32xf32>
    %39 = vector.broadcast %3 : vector<1x32xf32> to vector<8x32xf32>
    %40 = arith.addf %38, %39 : vector<8x32xf32>
    %41 = arith.truncf %35 : vector<8x128xf32> to vector<8x128xbf16>
    %c0_22 = arith.constant 0 : index
    %c0_23 = arith.constant 0 : index
    %42 = vector.load %arg6[%c0_22, %c0_23] : memref<128x192xbf16, #tpu.memory_space<vmem>>, vector<128x192xbf16>
    %cst_24 = arith.constant dense<0.000000e+00> : vector<8x192xf32>
    %43 = tpu.matmul %41, %42, %cst_24 {dimension_numbers = #tpu.dot_dimension_numbers<[1], [0], [0], [1], [0, 0, 1, 1], [], []>} : vector<8x128xbf16>, vector<128x192xbf16>, vector<8x192xf32> -> vector<8x192xf32>
    %cst_25 = arith.constant 0.000000e+00 : f32
    %44 = vector.broadcast %cst_25 : f32 to vector<8x32xf32>
    %45 = arith.maximumf %40, %44 : vector<8x32xf32>
    %46 = arith.truncf %45 : vector<8x32xf32> to vector<8x32xbf16>
    %c0_26 = arith.constant 0 : index
    %c0_27 = arith.constant 0 : index
    %47 = vector.load %arg7[%c0_26, %c0_27] : memref<32x192xbf16, #tpu.memory_space<vmem>>, vector<32x192xbf16>
    %cst_28 = arith.constant dense<0.000000e+00> : vector<8x192xf32>
    %48 = tpu.matmul %46, %47, %cst_28 {dimension_numbers = #tpu.dot_dimension_numbers<[1], [0], [0], [1], [0, 0, 1, 1], [], []>} : vector<8x32xbf16>, vector<32x192xbf16>, vector<8x192xf32> -> vector<8x192xf32>
    %49 = arith.addf %43, %48 : vector<8x192xf32>
    %50 = vector.broadcast %4 : vector<1x192xf32> to vector<8x192xf32>
    %51 = arith.addf %49, %50 : vector<8x192xf32>
    %cst_29 = arith.constant 0.000000e+00 : f32
    %52 = vector.broadcast %cst_29 : f32 to vector<8x192xf32>
    %53 = arith.maximumf %51, %52 : vector<8x192xf32>
    %c0_30 = arith.constant 0 : index
    %c0_31 = arith.constant 0 : index
    %54 = vector.load %arg9[%c0_30, %c0_31] : memref<8x384xf32, #tpu.memory_space<vmem>>, vector<8x128xf32>
    tpu.vector_store %arg9[%c0_30, %c0_31], %16 {strides = array<i32>} : memref<8x384xf32, #tpu.memory_space<vmem>>, vector<8x128xf32>,
    %c0_32 = arith.constant 0 : index
    %c128 = arith.constant 128 : index
    %55 = vector.load %arg9[%c0_32, %c128] : memref<8x384xf32, #tpu.memory_space<vmem>>, vector<8x192xf32>
    tpu.vector_store %arg9[%c0_32, %c128], %53 {strides = array<i32>} : memref<8x384xf32, #tpu.memory_space<vmem>>, vector<8x192xf32>,
    %c0_33 = arith.constant 0 : index
    %c320 = arith.constant 320 : index
    %56 = vector.load %arg9[%c0_33, %c320] : memref<8x384xf32, #tpu.memory_space<vmem>>, vector<8x32xf32>
    tpu.vector_store %arg9[%c0_33, %c320], %40 {strides = array<i32>} : memref<8x384xf32, #tpu.memory_space<vmem>>, vector<8x32xf32>,
    %c0_34 = arith.constant 0 : index
    %c352 = arith.constant 352 : index
    %57 = vector.load %arg9[%c0_34, %c352] : memref<8x384xf32, #tpu.memory_space<vmem>>, vector<8x16xf32>
    tpu.vector_store %arg9[%c0_34, %c352], %33 {strides = array<i32>} : memref<8x384xf32, #tpu.memory_space<vmem>>, vector<8x16xf32>,
    %cst_35 = arith.constant 0.000000e+00 : f32
    %58 = vector.broadcast %cst_35 : f32 to vector<8x16xf32>
    %c0_36 = arith.constant 0 : index
    %c368 = arith.constant 368 : index
    %59 = vector.load %arg9[%c0_36, %c368] : memref<8x384xf32, #tpu.memory_space<vmem>>, vector<8x16xf32>
    tpu.vector_store %arg9[%c0_36, %c368], %58 {strides = array<i32>} : memref<8x384xf32, #tpu.memory_space<vmem>>, vector<8x16xf32>,
    return
  }
  func.func @transform_0(%arg0: i32) -> (i32, i32) {
    %c0_i32 = arith.constant 0 : i32
    %c0_i32_0 = arith.constant 0 : i32
    return %arg0, %c0_i32 : i32, i32
  }
  func.func @transform_1(%arg0: i32) -> (i32, i32) {
    %c0_i32 = arith.constant 0 : i32
    %c0_i32_0 = arith.constant 0 : i32
    %c0_i32_1 = arith.constant 0 : i32
    return %c0_i32, %c0_i32_0 : i32, i32
  }
  func.func @transform_2(%arg0: i32) -> (i32, i32) {
    %c0_i32 = arith.constant 0 : i32
    %c0_i32_0 = arith.constant 0 : i32
    %c0_i32_1 = arith.constant 0 : i32
    return %c0_i32, %c0_i32_0 : i32, i32
  }
  func.func @transform_3(%arg0: i32) -> (i32, i32) {
    %c0_i32 = arith.constant 0 : i32
    %c0_i32_0 = arith.constant 0 : i32
    %c0_i32_1 = arith.constant 0 : i32
    return %c0_i32, %c0_i32_0 : i32, i32
  }
  func.func @transform_4(%arg0: i32) -> (i32, i32) {
    %c0_i32 = arith.constant 0 : i32
    %c0_i32_0 = arith.constant 0 : i32
    %c0_i32_1 = arith.constant 0 : i32
    return %c0_i32, %c0_i32_0 : i32, i32
  }
  func.func @transform_5(%arg0: i32) -> (i32, i32) {
    %c0_i32 = arith.constant 0 : i32
    %c0_i32_0 = arith.constant 0 : i32
    %c0_i32_1 = arith.constant 0 : i32
    return %c0_i32, %c0_i32_0 : i32, i32
  }
  func.func @transform_6(%arg0: i32) -> (i32, i32) {
    %c0_i32 = arith.constant 0 : i32
    %c0_i32_0 = arith.constant 0 : i32
    %c0_i32_1 = arith.constant 0 : i32
    return %c0_i32, %c0_i32_0 : i32, i32
  }
  func.func @transform_7(%arg0: i32) -> (i32, i32) {
    %c0_i32 = arith.constant 0 : i32
    %c0_i32_0 = arith.constant 0 : i32
    %c0_i32_1 = arith.constant 0 : i32
    return %c0_i32, %c0_i32_0 : i32, i32
  }
  func.func @transform_8(%arg0: i32) -> (i32, i32) {
    %c0_i32 = arith.constant 0 : i32
    %c0_i32_0 = arith.constant 0 : i32
    return %arg0, %c0_i32 : i32, i32
  }
}

</mosaic_0001>

<llo_original>
// kernel: forward.1
$region0: #{forward.1}
  #allocation0 [shape = 'u32[]', space=smem, size = 0x4, offset = 0x4, fixed_abs, tag = 'smem constant byte address 0x4 - core index']
  #allocation1 [shape = 'u32[144,128]{1,0:T(1,128)}', space=vmem, size = 0x12000, scoped, tag = 'internal scratch']
  %s0 = inlined_call_operand.vmem [shape: bf16[8,128], index: 0, kind: input, shape index: {}]
  %s1 = inlined_call_operand.vmem [shape: bf16[128,256], index: 1, kind: input, shape index: {}]
  %s2 = inlined_call_operand.vmem [shape: bf16[256,128], index: 2, kind: input, shape index: {}]
  %s3 = inlined_call_operand.vmem [shape: bf16[128,16], index: 3, kind: input, shape index: {}]
  %s4 = inlined_call_operand.vmem [shape: bf16[128,32], index: 4, kind: input, shape index: {}]
  %s5 = inlined_call_operand.vmem [shape: bf16[128,192], index: 5, kind: input, shape index: {}]
  %s6 = inlined_call_operand.vmem [shape: bf16[32,192], index: 6, kind: input, shape index: {}]
  %s7 = inlined_call_operand.vmem [shape: f32[1,896], index: 7, kind: input, shape index: {}]
  %s8 = inlined_call_operand.vmem [shape: f32[8,384], index: 8, kind: output, shape index: {}]
  %s9 = sld [smem:[#allocation0]]
  $region42: #{forward.1} parent=0
    _
  %s11 = ssub.s32 1, %s9
  %s12 = scalar_select 0, %s11, %s9
  // Predicated region
  $region2: #{forward.1} parent=0 // pred_check
    _
  $region3: #{forward.1} parent=0 // pred_check_branch
    %14 = sbr.rel (0) target = $region5
  $region4: #{forward.1} parent=0 // pred_region
    _
  $region5: #{forward.1} parent=0 // pred_fallthru
    _
  // Predicated region
  $region6: #{forward.1} parent=0 // pred_check
    _
  $region7: #{forward.1} parent=0 // pred_check_branch
    %16 = sbr.rel (0) target = $region9
  $region8: #{forward.1} parent=0 // pred_region
    _
  $region9: #{forward.1} parent=0 // pred_fallthru
    _
  // Predicated region
  $region10: #{forward.1} parent=0 // pred_check
    _
  $region11: #{forward.1} parent=0 // pred_check_branch
    %18 = sbr.rel (0) target = $region13
  $region12: #{forward.1} parent=0 // pred_region
    _
  $region13: #{forward.1} parent=0 // pred_fallthru
    _
  // Predicated region
  $region14: #{forward.1} parent=0 // pred_check
    _
  $region15: #{forward.1} parent=0 // pred_check_branch
    %20 = sbr.rel (0) target = $region17
  $region16: #{forward.1} parent=0 // pred_region
    _
  $region17: #{forward.1} parent=0 // pred_fallthru
    _
  // Predicated region
  $region18: #{forward.1} parent=0 // pred_check
    _
  $region19: #{forward.1} parent=0 // pred_check_branch
    %22 = sbr.rel (0) target = $region21
  $region20: #{forward.1} parent=0 // pred_region
    _
  $region21: #{forward.1} parent=0 // pred_fallthru
    _
  // Predicated region
  $region22: #{forward.1} parent=0 // pred_check
    _
  $region23: #{forward.1} parent=0 // pred_check_branch
    %24 = sbr.rel (0) target = $region25
  $region24: #{forward.1} parent=0 // pred_region
    _
  $region25: #{forward.1} parent=0 // pred_fallthru
    _
  // Predicated region
  $region26: #{forward.1} parent=0 // pred_check
    _
  $region27: #{forward.1} parent=0 // pred_check_branch
    %26 = sbr.rel (0) target = $region29
  $region28: #{forward.1} parent=0 // pred_region
    _
  $region29: #{forward.1} parent=0 // pred_fallthru
    _
  // Predicated region
  $region30: #{forward.1} parent=0 // pred_check
    _
  $region31: #{forward.1} parent=0 // pred_check_branch
    %28 = sbr.rel (0) target = $region33
  $region32: #{forward.1} parent=0 // pred_region
    _
  $region33: #{forward.1} parent=0 // pred_fallthru
    _
  %v30 = vld [vmem:[%s7] sm:$0x3]
  %v31 = vld [vmem:[%s7 + $0x2] sm:$0x1]
  %v32 = vld [vmem:[%s7 + $0x3] sm:$0x1]
  %v33 = vld [vmem:[%s7 + $0x4] sm:$0x1]
  %v34 = vld [vmem:[%s7 + $0x5] sm:$0x3]
  %v35 = vld [vmem:[%s0] sm:$0xf]
  %v36 = vld [vmem:[%s1] sm:$0xff]
  %v37 = vld [vmem:[%s1 + $0x8] sm:$0xff]
  %v38 = vld [vmem:[%s1 + $0x10] sm:$0xff]
  %v39 = vld [vmem:[%s1 + $0x18] sm:$0xff]
  %v40 = vld [vmem:[%s1 + $0x20] sm:$0xff]
  %v41 = vld [vmem:[%s1 + $0x28] sm:$0xff]
  %v42 = vld [vmem:[%s1 + $0x30] sm:$0xff]
  %v43 = vld [vmem:[%s1 + $0x38] sm:$0xff]
  %v44 = vld [vmem:[%s1 + $0x40] sm:$0xff]
  %v45 = vld [vmem:[%s1 + $0x48] sm:$0xff]
  %v46 = vld [vmem:[%s1 + $0x50] sm:$0xff]
  %v47 = vld [vmem:[%s1 + $0x58] sm:$0xff]
  %v48 = vld [vmem:[%s1 + $0x60] sm:$0xff]
  %v49 = vld [vmem:[%s1 + $0x68] sm:$0xff]
  %v50 = vld [vmem:[%s1 + $0x70] sm:$0xff]
  %v51 = vld [vmem:[%s1 + $0x78] sm:$0xff]
  %v53 = vlaneseq
  %v54 = vshrl.u32 %v53, 7
  %v55 = vsub.s32 0, %v54
  %v56 = vrot.slane %v30, %v55
  %v57 = vlaneseq
  %v58 = vshrl.u32 %v57, 7
  %v59 = vsub.s32 1, %v58
  %v60 = vrot.slane %v30, %v59
  %v79 = vunpack.c.l.b16 %v36
  %v80 = vunpack.c.h.b16 %v36
  %v81 = vunpack.c.l.b16 %v37
  %v82 = vunpack.c.h.b16 %v37
  %v83 = vunpack.c.l.b16 %v38
  %v84 = vunpack.c.h.b16 %v38
  %v85 = vunpack.c.l.b16 %v39
  %v86 = vunpack.c.h.b16 %v39
  %v87 = vunpack.c.l.b16 %v40
  %v88 = vunpack.c.h.b16 %v40
  %v89 = vunpack.c.l.b16 %v41
  %v90 = vunpack.c.h.b16 %v41
  %v91 = vunpack.c.l.b16 %v42
  %v92 = vunpack.c.h.b16 %v42
  %v93 = vunpack.c.l.b16 %v43
  %v94 = vunpack.c.h.b16 %v43
  %v95 = vunpack.c.l.b16 %v44
  %v96 = vunpack.c.h.b16 %v44
  %v97 = vunpack.c.l.b16 %v45
  %v98 = vunpack.c.h.b16 %v45
  %v99 = vunpack.c.l.b16 %v46
  %v100 = vunpack.c.h.b16 %v46
  %v101 = vunpack.c.l.b16 %v47
  %v102 = vunpack.c.h.b16 %v47
  %v103 = vunpack.c.l.b16 %v48
  %v104 = vunpack.c.h.b16 %v48
  %v105 = vunpack.c.l.b16 %v49
  %v106 = vunpack.c.h.b16 %v49
  %v107 = vunpack.c.l.b16 %v50
  %v108 = vunpack.c.h.b16 %v50
  %v109 = vunpack.c.l.b16 %v51
  %v110 = vunpack.c.h.b16 %v51
  %v111 = vpack.c.b16 %v81, %v79
  %v112 = vpack.c.b16 %v82, %v80
  %v113 = vpack.c.b16 %v85, %v83
  %v114 = vpack.c.b16 %v86, %v84
  %v115 = vpack.c.b16 %v89, %v87
  %v116 = vpack.c.b16 %v90, %v88
  %v117 = vpack.c.b16 %v93, %v91
  %v118 = vpack.c.b16 %v94, %v92
  %v119 = vpack.c.b16 %v97, %v95
  %v120 = vpack.c.b16 %v98, %v96
  %v121 = vpack.c.b16 %v101, %v99
  %v122 = vpack.c.b16 %v102, %v100
  %v123 = vpack.c.b16 %v105, %v103
  %v124 = vpack.c.b16 %v106, %v104
  %v125 = vpack.c.b16 %v109, %v107
  %v126 = vpack.c.b16 %v110, %v108
  %143 = vmatprep.subr.bf16.mxu0 %v112
  %144 = vmatpush1.bf16.msra.mxu0 %v111
  %145 = vmatprep.subr.bf16.mxu0 %v114
  %146 = vmatpush1.bf16.msra.mxu0 %v113
  %147 = vmatprep.subr.bf16.mxu0 %v116
  %148 = vmatpush1.bf16.msra.mxu0 %v115
  %149 = vmatprep.subr.bf16.mxu0 %v118
  %150 = vmatpush1.bf16.msra.mxu0 %v117
  %151 = vmatprep.subr.bf16.mxu0 %v120
  %152 = vmatpush1.bf16.msra.mxu0 %v119
  %153 = vmatprep.subr.bf16.mxu0 %v122
  %154 = vmatpush1.bf16.msra.mxu0 %v121
  %155 = vmatprep.subr.bf16.mxu0 %v124
  %156 = vmatpush1.bf16.msra.mxu0 %v123
  %157 = vmatprep.subr.bf16.mxu0 %v126
  %158 = vmatpush1.bf16.msra.mxu0 %v125
  %159 = vmatprep.subr.bf16.mxu0 0
  %160 = vmatpush1.bf16.msra.mxu0 0
  %161 = vmatprep.subr.bf16.mxu0 0
  %162 = vmatpush1.bf16.msra.mxu0 0
  %163 = vmatprep.subr.bf16.mxu0 0
  %164 = vmatpush1.bf16.msra.mxu0 0
  %165 = vmatprep.subr.bf16.mxu0 0
  %166 = vmatpush1.bf16.msra.mxu0 0
  %167 = vmatprep.subr.bf16.mxu0 0
  %168 = vmatpush1.bf16.msra.mxu0 0
  %169 = vmatprep.subr.bf16.mxu0 0
  %170 = vmatpush1.bf16.msra.mxu0 0
  %171 = vmatprep.subr.bf16.mxu0 0
  %172 = vmatpush1.bf16.msra.mxu0 0
  %173 = vmatprep.subr.bf16.mxu0 0
  %174 = vmatpush1.bf16.msra.mxu0 0
  %175 = vmatprep.mubr.bf16.mxu0 0
  %176 = vmatmul.mubr.bf16.gmra.mrb[0].mxu0 %v35
  %v177 = vpop.f32.mrb[0].mxu0
  %v178 = vadd.f32 %v56, %v177
  %v179 = vpop.f32.mrb[0].mxu0
  %v180 = vadd.f32 %v60, %v179
  %v181 = vpop.f32.mrb[0].mxu0
  %v182 = vpop.f32.mrb[0].mxu0
  %183 = vdwg.mxu0
  %v184 = vmax.f32 %v178, 0.0
  %v185 = vmax.f32 %v180, 0.0
  %v186 = vpack.c.bf16 %v184, %v184
  %v187 = vpack.c.bf16 %v185, %v185
  %v188 = vld [vmem:[%s2] sm:$0xf]
  %v189 = vld [vmem:[%s2 + $0x4] sm:$0xf]
  %v190 = vld [vmem:[%s2 + $0x8] sm:$0xf]
  %v191 = vld [vmem:[%s2 + $0xc] sm:$0xf]
  %v192 = vld [vmem:[%s2 + $0x10] sm:$0xf]
  %v193 = vld [vmem:[%s2 + $0x14] sm:$0xf]
  %v194 = vld [vmem:[%s2 + $0x18] sm:$0xf]
  %v195 = vld [vmem:[%s2 + $0x1c] sm:$0xf]
  %v196 = vld [vmem:[%s2 + $0x20] sm:$0xf]
  %v197 = vld [vmem:[%s2 + $0x24] sm:$0xf]
  %v198 = vld [vmem:[%s2 + $0x28] sm:$0xf]
  %v199 = vld [vmem:[%s2 + $0x2c] sm:$0xf]
  %v200 = vld [vmem:[%s2 + $0x30] sm:$0xf]
  %v201 = vld [vmem:[%s2 + $0x34] sm:$0xf]
  %v202 = vld [vmem:[%s2 + $0x38] sm:$0xf]
  %v203 = vld [vmem:[%s2 + $0x3c] sm:$0xf]
  %v204 = vld [vmem:[%s2 + $0x40] sm:$0xf]
  %v205 = vld [vmem:[%s2 + $0x44] sm:$0xf]
  %v206 = vld [vmem:[%s2 + $0x48] sm:$0xf]
  %v207 = vld [vmem:[%s2 + $0x4c] sm:$0xf]
  %v208 = vld [vmem:[%s2 + $0x50] sm:$0xf]
  %v209 = vld [vmem:[%s2 + $0x54] sm:$0xf]
  %v210 = vld [vmem:[%s2 + $0x58] sm:$0xf]
  %v211 = vld [vmem:[%s2 + $0x5c] sm:$0xf]
  %v212 = vld [vmem:[%s2 + $0x60] sm:$0xf]
  %v213 = vld [vmem:[%s2 + $0x64] sm:$0xf]
  %v214 = vld [vmem:[%s2 + $0x68] sm:$0xf]
  %v215 = vld [vmem:[%s2 + $0x6c] sm:$0xf]
  %v216 = vld [vmem:[%s2 + $0x70] sm:$0xf]
  %v217 = vld [vmem:[%s2 + $0x74] sm:$0xf]
  %v218 = vld [vmem:[%s2 + $0x78] sm:$0xf]
  %v219 = vld [vmem:[%s2 + $0x7c] sm:$0xf]
  %v221 = vlaneseq
  %v222 = vshrl.u32 %v221, 7
  %v223 = vsub.s32 0, %v222
  %v224 = vrot.slane %v31, %v223
  %v258 = vunpack.c.l.b16 %v188
  %v259 = vunpack.c.l.b16 %v189
  %v260 = vunpack.c.l.b16 %v190
  %v261 = vunpack.c.l.b16 %v191
  %v262 = vunpack.c.l.b16 %v192
  %v263 = vunpack.c.l.b16 %v193
  %v264 = vunpack.c.l.b16 %v194
  %v265 = vunpack.c.l.b16 %v195
  %v266 = vunpack.c.l.b16 %v196
  %v267 = vunpack.c.l.b16 %v197
  %v268 = vunpack.c.l.b16 %v198
  %v269 = vunpack.c.l.b16 %v199
  %v270 = vunpack.c.l.b16 %v200
  %v271 = vunpack.c.l.b16 %v201
  %v272 = vunpack.c.l.b16 %v202
  %v273 = vunpack.c.l.b16 %v203
  %v274 = vunpack.c.l.b16 %v204
  %v275 = vunpack.c.l.b16 %v205
  %v276 = vunpack.c.l.b16 %v206
  %v277 = vunpack.c.l.b16 %v207
  %v278 = vunpack.c.l.b16 %v208
  %v279 = vunpack.c.l.b16 %v209
  %v280 = vunpack.c.l.b16 %v210
  %v281 = vunpack.c.l.b16 %v211
  %v282 = vunpack.c.l.b16 %v212
  %v283 = vunpack.c.l.b16 %v213
  %v284 = vunpack.c.l.b16 %v214
  %v285 = vunpack.c.l.b16 %v215
  %v286 = vunpack.c.l.b16 %v216
  %v287 = vunpack.c.l.b16 %v217
  %v288 = vunpack.c.l.b16 %v218
  %v289 = vunpack.c.l.b16 %v219
  %v290 = vpack.c.b16 %v259, %v258
  %v291 = vpack.c.b16 %v261, %v260
  %v292 = vpack.c.b16 %v263, %v262
  %v293 = vpack.c.b16 %v265, %v264
  %v294 = vpack.c.b16 %v267, %v266
  %v295 = vpack.c.b16 %v269, %v268
  %v296 = vpack.c.b16 %v271, %v270
  %v297 = vpack.c.b16 %v273, %v272
  %v298 = vpack.c.b16 %v275, %v274
  %v299 = vpack.c.b16 %v277, %v276
  %v300 = vpack.c.b16 %v279, %v278
  %v301 = vpack.c.b16 %v281, %v280
  %v302 = vpack.c.b16 %v283, %v282
  %v303 = vpack.c.b16 %v285, %v284
  %v304 = vpack.c.b16 %v287, %v286
  %v305 = vpack.c.b16 %v289, %v288
  %322 = vmatprep.subr.bf16.mxu0 0
  %323 = vmatpush1.bf16.msra.mxu0 %v290
  %324 = vmatprep.subr.bf16.mxu0 0
  %325 = vmatpush1.bf16.msra.mxu0 %v291
  %326 = vmatprep.subr.bf16.mxu0 0
  %327 = vmatpush1.bf16.msra.mxu0 %v292
  %328 = vmatprep.subr.bf16.mxu0 0
  %329 = vmatpush1.bf16.msra.mxu0 %v293
  %330 = vmatprep.subr.bf16.mxu0 0
  %331 = vmatpush1.bf16.msra.mxu0 %v294
  %332 = vmatprep.subr.bf16.mxu0 0
  %333 = vmatpush1.bf16.msra.mxu0 %v295
  %334 = vmatprep.subr.bf16.mxu0 0
  %335 = vmatpush1.bf16.msra.mxu0 %v296
  %336 = vmatprep.subr.bf16.mxu0 0
  %337 = vmatpush1.bf16.msra.mxu0 %v297
  %338 = vmatprep.subr.bf16.mxu0 0
  %339 = vmatpush1.bf16.msra.mxu0 %v298
  %340 = vmatprep.subr.bf16.mxu0 0
  %341 = vmatpush1.bf16.msra.mxu0 %v299
  %342 = vmatprep.subr.bf16.mxu0 0
  %343 = vmatpush1.bf16.msra.mxu0 %v300
  %344 = vmatprep.subr.bf16.mxu0 0
  %345 = vmatpush1.bf16.msra.mxu0 %v301
  %346 = vmatprep.subr.bf16.mxu0 0
  %347 = vmatpush1.bf16.msra.mxu0 %v302
  %348 = vmatprep.subr.bf16.mxu0 0
  %349 = vmatpush1.bf16.msra.mxu0 %v303
  %350 = vmatprep.subr.bf16.mxu0 0
  %351 = vmatpush1.bf16.msra.mxu0 %v304
  %352 = vmatprep.subr.bf16.mxu0 0
  %353 = vmatpush1.bf16.msra.mxu0 %v305
  %354 = vmatprep.mubr.bf16.mxu0 %v187
  %355 = vmatmul.mubr.bf16.gmra.mrb[0].mxu0 %v186
  %v356 = vpop.f32.mrb[0].mxu0
  %v357 = vadd.f32 %v224, %v356
  %v358 = vpop.f32.mrb[0].mxu0
  %v359 = vpop.f32.mrb[0].mxu0
  %v360 = vpop.f32.mrb[0].mxu0
  %361 = vdwg.mxu0
  %v362 = vpack.c.bf16 %v357, %v357
  %v363 = vld [vmem:[%s3] sm:$0xf]
  %v364 = vld [vmem:[%s3 + $0x4] sm:$0xf]
  %v365 = vld [vmem:[%s3 + $0x8] sm:$0xf]
  %v366 = vld [vmem:[%s3 + $0xc] sm:$0xf]
  %v367 = vld [vmem:[%s3 + $0x10] sm:$0xf]
  %v368 = vld [vmem:[%s3 + $0x14] sm:$0xf]
  %v369 = vld [vmem:[%s3 + $0x18] sm:$0xf]
  %v370 = vld [vmem:[%s3 + $0x1c] sm:$0xf]
  %v371 = vld [vmem:[%s3 + $0x20] sm:$0xf]
  %v372 = vld [vmem:[%s3 + $0x24] sm:$0xf]
  %v373 = vld [vmem:[%s3 + $0x28] sm:$0xf]
  %v374 = vld [vmem:[%s3 + $0x2c] sm:$0xf]
  %v375 = vld [vmem:[%s3 + $0x30] sm:$0xf]
  %v376 = vld [vmem:[%s3 + $0x34] sm:$0xf]
  %v377 = vld [vmem:[%s3 + $0x38] sm:$0xf]
  %v378 = vld [vmem:[%s3 + $0x3c] sm:$0xf]
  %v380 = vlaneseq
  %v381 = vshrl.u32 %v380, 7
  %v382 = vsub.s32 0, %v381
  %v383 = vrot.slane %v32, %v382
  %v401 = vunpack.c.l.b16 %v363
  %v402 = vunpack.c.l.b16 %v364
  %v403 = vunpack.c.l.b16 %v365
  %v404 = vunpack.c.l.b16 %v366
  %v405 = vunpack.c.l.b16 %v367
  %v406 = vunpack.c.l.b16 %v368
  %v407 = vunpack.c.l.b16 %v369
  %v408 = vunpack.c.l.b16 %v370
  %v409 = vunpack.c.l.b16 %v371
  %v410 = vunpack.c.l.b16 %v372
  %v411 = vunpack.c.l.b16 %v373
  %v412 = vunpack.c.l.b16 %v374
  %v413 = vunpack.c.l.b16 %v375
  %v414 = vunpack.c.l.b16 %v376
  %v415 = vunpack.c.l.b16 %v377
  %v416 = vunpack.c.l.b16 %v378
  %v417 = vpack.c.b16 %v402, %v401
  %v418 = vpack.c.b16 %v404, %v403
  %v419 = vpack.c.b16 %v406, %v405
  %v420 = vpack.c.b16 %v408, %v407
  %v421 = vpack.c.b16 %v410, %v409
  %v422 = vpack.c.b16 %v412, %v411
  %v423 = vpack.c.b16 %v414, %v413
  %v424 = vpack.c.b16 %v416, %v415
  %433 = vmatprep.subr.bf16.mxu0 0
  %434 = vmatpush1.bf16.msra.mxu0 %v417
  %435 = vmatprep.subr.bf16.mxu0 0
  %436 = vmatpush1.bf16.msra.mxu0 %v418
  %437 = vmatprep.subr.bf16.mxu0 0
  %438 = vmatpush1.bf16.msra.mxu0 %v419
  %439 = vmatprep.subr.bf16.mxu0 0
  %440 = vmatpush1.bf16.msra.mxu0 %v420
  %441 = vmatprep.subr.bf16.mxu0 0
  %442 = vmatpush1.bf16.msra.mxu0 %v421
  %443 = vmatprep.subr.bf16.mxu0 0
  %444 = vmatpush1.bf16.msra.mxu0 %v422
  %445 = vmatprep.subr.bf16.mxu0 0
  %446 = vmatpush1.bf16.msra.mxu0 %v423
  %447 = vmatprep.subr.bf16.mxu0 0
  %448 = vmatpush1.bf16.msra.mxu0 %v424
  %449 = vmatprep.subr.bf16.mxu0 0
  %450 = vmatpush1.bf16.msra.mxu0 0
  %451 = vmatprep.subr.bf16.mxu0 0
  %452 = vmatpush1.bf16.msra.mxu0 0
  %453 = vmatprep.subr.bf16.mxu0 0
  %454 = vmatpush1.bf16.msra.mxu0 0
  %455 = vmatprep.subr.bf16.mxu0 0
  %456 = vmatpush1.bf16.msra.mxu0 0
  %457 = vmatprep.subr.bf16.mxu0 0
  %458 = vmatpush1.bf16.msra.mxu0 0
  %459 = vmatprep.subr.bf16.mxu0 0
  %460 = vmatpush1.bf16.msra.mxu0 0
  %461 = vmatprep.subr.bf16.mxu0 0
  %462 = vmatpush1.bf16.msra.mxu0 0
  %463 = vmatprep.subr.bf16.mxu0 0
  %464 = vmatpush1.bf16.msra.mxu0 0
  %465 = vmatprep.mubr.bf16.mxu0 0
  %466 = vmatmul.mubr.bf16.gmra.mrb[0].mxu0 %v362
  %v467 = vpop.f32.mrb[0].mxu0
  %v468 = vadd.f32 %v383, %v467
  %v469 = vpop.f32.mrb[0].mxu0
  %v470 = vpop.f32.mrb[0].mxu0
  %v471 = vpop.f32.mrb[0].mxu0
  %472 = vdwg.mxu0
  %vm473 = vcmask 130048
  %v474 = vsel %vm473, %v468, -inf
  %475 = vmax.xlane.f32.xlu0 %v474
  %v476 = vpop.xlane.xlu0 %475
  %v477 = vsub.f32 %v468, %v476
  %v478 = vmul.f32 %v477, 1.442695
  %v479 = vpow.pop %v478
  %v480 = vsel %vm473, %v479, 0.0
  %481 = vadd.xlane.f32.xlu0 %v480
  %v482 = vpop.xlane.xlu0 %481
  %v483 = vlog2.pop %v482
  %v484 = vmul.f32 %v483, 0.6931472
  %v485 = vsub.f32 %v477, %v484
  %v486 = vmax.f32 %v357, 0.0
  %v487 = vpack.c.bf16 %v486, %v486
  %v488 = vld [vmem:[%s4] sm:$0xf]
  %v489 = vld [vmem:[%s4 + $0x4] sm:$0xf]
  %v490 = vld [vmem:[%s4 + $0x8] sm:$0xf]
  %v491 = vld [vmem:[%s4 + $0xc] sm:$0xf]
  %v492 = vld [vmem:[%s4 + $0x10] sm:$0xf]
  %v493 = vld [vmem:[%s4 + $0x14] sm:$0xf]
  %v494 = vld [vmem:[%s4 + $0x18] sm:$0xf]
  %v495 = vld [vmem:[%s4 + $0x1c] sm:$0xf]
  %v496 = vld [vmem:[%s4 + $0x20] sm:$0xf]
  %v497 = vld [vmem:[%s4 + $0x24] sm:$0xf]
  %v498 = vld [vmem:[%s4 + $0x28] sm:$0xf]
  %v499 = vld [vmem:[%s4 + $0x2c] sm:$0xf]
  %v500 = vld [vmem:[%s4 + $0x30] sm:$0xf]
  %v501 = vld [vmem:[%s4 + $0x34] sm:$0xf]
  %v502 = vld [vmem:[%s4 + $0x38] sm:$0xf]
  %v503 = vld [vmem:[%s4 + $0x3c] sm:$0xf]
  %v505 = vlaneseq
  %v506 = vshrl.u32 %v505, 7
  %v507 = vsub.s32 0, %v506
  %v508 = vrot.slane %v33, %v507
  %v526 = vunpack.c.l.b16 %v488
  %v527 = vunpack.c.l.b16 %v489
  %v528 = vunpack.c.l.b16 %v490
  %v529 = vunpack.c.l.b16 %v491
  %v530 = vunpack.c.l.b16 %v492
  %v531 = vunpack.c.l.b16 %v493
  %v532 = vunpack.c.l.b16 %v494
  %v533 = vunpack.c.l.b16 %v495
  %v534 = vunpack.c.l.b16 %v496
  %v535 = vunpack.c.l.b16 %v497
  %v536 = vunpack.c.l.b16 %v498
  %v537 = vunpack.c.l.b16 %v499
  %v538 = vunpack.c.l.b16 %v500
  %v539 = vunpack.c.l.b16 %v501
  %v540 = vunpack.c.l.b16 %v502
  %v541 = vunpack.c.l.b16 %v503
  %v542 = vpack.c.b16 %v527, %v526
  %v543 = vpack.c.b16 %v529, %v528
  %v544 = vpack.c.b16 %v531, %v530
  %v545 = vpack.c.b16 %v533, %v532
  %v546 = vpack.c.b16 %v535, %v534
  %v547 = vpack.c.b16 %v537, %v536
  %v548 = vpack.c.b16 %v539, %v538
  %v549 = vpack.c.b16 %v541, %v540
  %558 = vmatprep.subr.bf16.mxu0 0
  %559 = vmatpush1.bf16.msra.mxu0 %v542
  %560 = vmatprep.subr.bf16.mxu0 0
  %561 = vmatpush1.bf16.msra.mxu0 %v543
  %562 = vmatprep.subr.bf16.mxu0 0
  %563 = vmatpush1.bf16.msra.mxu0 %v544
  %564 = vmatprep.subr.bf16.mxu0 0
  %565 = vmatpush1.bf16.msra.mxu0 %v545
  %566 = vmatprep.subr.bf16.mxu0 0
  %567 = vmatpush1.bf16.msra.mxu0 %v546
  %568 = vmatprep.subr.bf16.mxu0 0
  %569 = vmatpush1.bf16.msra.mxu0 %v547
  %570 = vmatprep.subr.bf16.mxu0 0
  %571 = vmatpush1.bf16.msra.mxu0 %v548
  %572 = vmatprep.subr.bf16.mxu0 0
  %573 = vmatpush1.bf16.msra.mxu0 %v549
  %574 = vmatprep.subr.bf16.mxu0 0
  %575 = vmatpush1.bf16.msra.mxu0 0
  %576 = vmatprep.subr.bf16.mxu0 0
  %577 = vmatpush1.bf16.msra.mxu0 0
  %578 = vmatprep.subr.bf16.mxu0 0
  %579 = vmatpush1.bf16.msra.mxu0 0
  %580 = vmatprep.subr.bf16.mxu0 0
  %581 = vmatpush1.bf16.msra.mxu0 0
  %582 = vmatprep.subr.bf16.mxu0 0
  %583 = vmatpush1.bf16.msra.mxu0 0
  %584 = vmatprep.subr.bf16.mxu0 0
  %585 = vmatpush1.bf16.msra.mxu0 0
  %586 = vmatprep.subr.bf16.mxu0 0
  %587 = vmatpush1.bf16.msra.mxu0 0
  %588 = vmatprep.subr.bf16.mxu0 0
  %589 = vmatpush1.bf16.msra.mxu0 0
  %590 = vmatprep.mubr.bf16.mxu0 0
  %591 = vmatmul.mubr.bf16.gmra.mrb[0].mxu0 %v487
  %v592 = vpop.f32.mrb[0].mxu0
  %v593 = vadd.f32 %v508, %v592
  %v594 = vpop.f32.mrb[0].mxu0
  %v595 = vpop.f32.mrb[0].mxu0
  %v596 = vpop.f32.mrb[0].mxu0
  %597 = vdwg.mxu0
  %v598 = vld [vmem:[%s5] sm:$0xff]
  %v599 = vld [vmem:[%s5 + $0x8] sm:$0xff]
  %v600 = vld [vmem:[%s5 + $0x10] sm:$0xff]
  %v601 = vld [vmem:[%s5 + $0x18] sm:$0xff]
  %v602 = vld [vmem:[%s5 + $0x20] sm:$0xff]
  %v603 = vld [vmem:[%s5 + $0x28] sm:$0xff]
  %v604 = vld [vmem:[%s5 + $0x30] sm:$0xff]
  %v605 = vld [vmem:[%s5 + $0x38] sm:$0xff]
  %v606 = vld [vmem:[%s5 + $0x40] sm:$0xff]
  %v607 = vld [vmem:[%s5 + $0x48] sm:$0xff]
  %v608 = vld [vmem:[%s5 + $0x50] sm:$0xff]
  %v609 = vld [vmem:[%s5 + $0x58] sm:$0xff]
  %v610 = vld [vmem:[%s5 + $0x60] sm:$0xff]
  %v611 = vld [vmem:[%s5 + $0x68] sm:$0xff]
  %v612 = vld [vmem:[%s5 + $0x70] sm:$0xff]
  %v613 = vld [vmem:[%s5 + $0x78] sm:$0xff]
  %v614 = vmax.f32 %v593, 0.0
  %v615 = vpack.c.bf16 %v614, %v614
  %v616 = vld [vmem:[%s6] sm:$0xff]
  %v617 = vld [vmem:[%s6 + $0x8] sm:$0xff]
  %v618 = vld [vmem:[%s6 + $0x10] sm:$0xff]
  %v619 = vld [vmem:[%s6 + $0x18] sm:$0xff]
  %v624 = vunpack.c.l.b16 %v616
  %v625 = vunpack.c.h.b16 %v616
  %v626 = vunpack.c.l.b16 %v617
  %v627 = vunpack.c.h.b16 %v617
  %v628 = vunpack.c.l.b16 %v618
  %v629 = vunpack.c.h.b16 %v618
  %v630 = vunpack.c.l.b16 %v619
  %v631 = vunpack.c.h.b16 %v619
  %v632 = vpack.c.b16 %v626, %v624
  %v633 = vpack.c.b16 %v627, %v625
  %v634 = vpack.c.b16 %v630, %v628
  %v635 = vpack.c.b16 %v631, %v629
  %vm640 = vcmask 261120
  %v642 = vsel %vm640, %v615, 0
  %644 = vmatprep.subr.bf16.mxu0 %v633
  %645 = vmatpush1.bf16.msra.mxu0 %v632
  %646 = vmatprep.subr.bf16.mxu0 %v635
  %647 = vmatpush1.bf16.msra.mxu0 %v634
  %648 = vmatprep.subr.bf16.mxu0 0
  %649 = vmatpush1.bf16.msra.mxu0 0
  %650 = vmatprep.subr.bf16.mxu0 0
  %651 = vmatpush1.bf16.msra.mxu0 0
  %652 = vmatprep.subr.bf16.mxu0 0
  %653 = vmatpush1.bf16.msra.mxu0 0
  %654 = vmatprep.subr.bf16.mxu0 0
  %655 = vmatpush1.bf16.msra.mxu0 0
  %656 = vmatprep.subr.bf16.mxu0 0
  %657 = vmatpush1.bf16.msra.mxu0 0
  %658 = vmatprep.subr.bf16.mxu0 0
  %659 = vmatpush1.bf16.msra.mxu0 0
  %660 = vmatprep.subr.bf16.mxu0 0
  %661 = vmatpush1.bf16.msra.mxu0 0
  %662 = vmatprep.subr.bf16.mxu0 0
  %663 = vmatpush1.bf16.msra.mxu0 0
  %664 = vmatprep.subr.bf16.mxu0 0
  %665 = vmatpush1.bf16.msra.mxu0 0
  %666 = vmatprep.subr.bf16.mxu0 0
  %667 = vmatpush1.bf16.msra.mxu0 0
  %668 = vmatprep.subr.bf16.mxu0 0
  %669 = vmatpush1.bf16.msra.mxu0 0
  %670 = vmatprep.subr.bf16.mxu0 0
  %671 = vmatpush1.bf16.msra.mxu0 0
  %672 = vmatprep.subr.bf16.mxu0 0
  %673 = vmatpush1.bf16.msra.mxu0 0
  %674 = vmatprep.subr.bf16.mxu0 0
  %675 = vmatpush1.bf16.msra.mxu0 0
  %676 = vmatprep.mubr.bf16.mxu0 0
  %677 = vmatmul.mubr.bf16.gmra.mrb[0].mxu0 %v642
  %v678 = vpop.f32.mrb[0].mxu0
  %v679 = vadd.f32 0.0, %v678
  %v680 = vpop.f32.mrb[0].mxu0
  %v681 = vadd.f32 0.0, %v680
  %v682 = vpop.f32.mrb[0].mxu0
  %v683 = vpop.f32.mrb[0].mxu0
  %684 = vdwg.mxu0
  %v701 = vunpack.c.l.b16 %v598
  %v702 = vunpack.c.h.b16 %v598
  %v703 = vunpack.c.l.b16 %v599
  %v704 = vunpack.c.h.b16 %v599
  %v705 = vunpack.c.l.b16 %v600
  %v706 = vunpack.c.h.b16 %v600
  %v707 = vunpack.c.l.b16 %v601
  %v708 = vunpack.c.h.b16 %v601
  %v709 = vunpack.c.l.b16 %v602
  %v710 = vunpack.c.h.b16 %v602
  %v711 = vunpack.c.l.b16 %v603
  %v712 = vunpack.c.h.b16 %v603
  %v713 = vunpack.c.l.b16 %v604
  %v714 = vunpack.c.h.b16 %v604
  %v715 = vunpack.c.l.b16 %v605
  %v716 = vunpack.c.h.b16 %v605
  %v717 = vunpack.c.l.b16 %v606
  %v718 = vunpack.c.h.b16 %v606
  %v719 = vunpack.c.l.b16 %v607
  %v720 = vunpack.c.h.b16 %v607
  %v721 = vunpack.c.l.b16 %v608
  %v722 = vunpack.c.h.b16 %v608
  %v723 = vunpack.c.l.b16 %v609
  %v724 = vunpack.c.h.b16 %v609
  %v725 = vunpack.c.l.b16 %v610
  %v726 = vunpack.c.h.b16 %v610
  %v727 = vunpack.c.l.b16 %v611
  %v728 = vunpack.c.h.b16 %v611
  %v729 = vunpack.c.l.b16 %v612
  %v730 = vunpack.c.h.b16 %v612
  %v731 = vunpack.c.l.b16 %v613
  %v732 = vunpack.c.h.b16 %v613
  %v733 = vpack.c.b16 %v703, %v701
  %v734 = vpack.c.b16 %v704, %v702
  %v735 = vpack.c.b16 %v707, %v705
  %v736 = vpack.c.b16 %v708, %v706
  %v737 = vpack.c.b16 %v711, %v709
  %v738 = vpack.c.b16 %v712, %v710
  %v739 = vpack.c.b16 %v715, %v713
  %v740 = vpack.c.b16 %v716, %v714
  %v741 = vpack.c.b16 %v719, %v717
  %v742 = vpack.c.b16 %v720, %v718
  %v743 = vpack.c.b16 %v723, %v721
  %v744 = vpack.c.b16 %v724, %v722
  %v745 = vpack.c.b16 %v727, %v725
  %v746 = vpack.c.b16 %v728, %v726
  %v747 = vpack.c.b16 %v731, %v729
  %v748 = vpack.c.b16 %v732, %v730
  %765 = vmatprep.subr.bf16.mxu0 %v734
  %766 = vmatpush1.bf16.msra.mxu0 %v733
  %767 = vmatprep.subr.bf16.mxu0 %v736
  %768 = vmatpush1.bf16.msra.mxu0 %v735
  %769 = vmatprep.subr.bf16.mxu0 %v738
  %770 = vmatpush1.bf16.msra.mxu0 %v737
  %771 = vmatprep.subr.bf16.mxu0 %v740
  %772 = vmatpush1.bf16.msra.mxu0 %v739
  %773 = vmatprep.subr.bf16.mxu0 %v742
  %774 = vmatpush1.bf16.msra.mxu0 %v741
  %775 = vmatprep.subr.bf16.mxu0 %v744
  %776 = vmatpush1.bf16.msra.mxu0 %v743
  %777 = vmatprep.subr.bf16.mxu0 %v746
  %778 = vmatpush1.bf16.msra.mxu0 %v745
  %779 = vmatprep.subr.bf16.mxu0 %v748
  %780 = vmatpush1.bf16.msra.mxu0 %v747
  %781 = vmatprep.subr.bf16.mxu0 0
  %782 = vmatpush1.bf16.msra.mxu0 0
  %783 = vmatprep.subr.bf16.mxu0 0
  %784 = vmatpush1.bf16.msra.mxu0 0
  %785 = vmatprep.subr.bf16.mxu0 0
  %786 = vmatpush1.bf16.msra.mxu0 0
  %787 = vmatprep.subr.bf16.mxu0 0
  %788 = vmatpush1.bf16.msra.mxu0 0
  %789 = vmatprep.subr.bf16.mxu0 0
  %790 = vmatpush1.bf16.msra.mxu0 0
  %791 = vmatprep.subr.bf16.mxu0 0
  %792 = vmatpush1.bf16.msra.mxu0 0
  %793 = vmatprep.subr.bf16.mxu0 0
  %794 = vmatpush1.bf16.msra.mxu0 0
  %795 = vmatprep.subr.bf16.mxu0 0
  %796 = vmatpush1.bf16.msra.mxu0 0
  %797 = vmatprep.mubr.bf16.mxu0 0
  %798 = vmatmul.mubr.bf16.gmra.mrb[0].mxu0 %v487
  %v799 = vpop.f32.mrb[0].mxu0
  %v800 = vadd.f32 %v679, %v799
  %v801 = vpop.f32.mrb[0].mxu0
  %v802 = vadd.f32 %v681, %v801
  %v803 = vpop.f32.mrb[0].mxu0
  %v804 = vpop.f32.mrb[0].mxu0
  %805 = vdwg.mxu0
  %v807 = vlaneseq
  %v808 = vshrl.u32 %v807, 7
  %v809 = vsub.s32 0, %v808
  %v810 = vrot.slane %v34, %v809
  %v811 = vlaneseq
  %v812 = vshrl.u32 %v811, 7
  %v813 = vsub.s32 1, %v812
  %v814 = vrot.slane %v34, %v813
  %v817 = vadd.f32 %v800, %v810
  %v818 = vadd.f32 %v802, %v814
  %v819 = vmax.f32 %v817, 0.0
  %v820 = vmax.f32 %v818, 0.0
  %821 = vst [vmem:[%s8] sm:$0xff] %v357
  %822 = vst [vmem:[%s8 + $0x8] sm:$0xff] %v819
  %vm823 = vcmask 523264
  %824 = vst.msk [vmem:[%s8 + $0x10] sm:$0xff] %vm823, %v820
  %826 = vrot.lane.b32.xlu0 %v593, 64
  %v827 = vpop.permute.xlu0 %826
  %vm829 = vcmask 785920
  %830 = vst.msk [vmem:[%s8 + $0x10] sm:$0xff] %vm829, %v827
  %832 = vrot.lane.b32.xlu0 %v485, 96
  %v833 = vpop.permute.xlu0 %832
  %vm835 = vcmask 917248
  %836 = vst.msk [vmem:[%s8 + $0x10] sm:$0xff] %vm835, %v833
  %vm837 = vcmask 1048448
  %838 = vst.msk [vmem:[%s8 + $0x10] sm:$0xff] %vm837, 0.0
  // Predicated region
  $region34: #{forward.1} parent=0 // pred_check
    _
  $region35: #{forward.1} parent=0 // pred_check_branch
    %840 = sbr.rel (0) target = $region37
  $region36: #{forward.1} parent=0 // pred_region
    _
  $region37: #{forward.1} parent=0 // pred_fallthru
    _
  // Predicated region
  $region38: #{forward.1} parent=0 // pred_check
    _
  $region39: #{forward.1} parent=0 // pred_check_branch
    %842 = sbr.rel (0) target = $region41
  $region40: #{forward.1} parent=0 // pred_region
    _
  $region41: #{forward.1} parent=0 // pred_fallthru
    _

</llo_original>
